<compile_context>
chip_gen: v6e
topology: v6e:2x2x1
jax: 0.10.0
libtpu: 0.0.40
codegen_flags: <defaults>
</compile_context>

<pallas_src>
import jax
import jax.numpy as jnp
from jax.experimental import pallas as pl
from jax.experimental.pallas import tpu as pltpu


def _round_up(x, m):
    return ((x + m - 1) // m) * m


# ------------------------------ fused kernel ------------------------------
def _scale_block_kernel(x_ref, wq_ref, bq_ref, wp_ref, bp_ref, wo_ref, bo_ref,
                        w2_ref, b2_ref, xenc_ref, merge_ref):
    # x block: (1, rows, T*D) -- TB stacked batch elements, lane-dense layout.
    x = x_ref[0]                                                   # (rows, T*D) f32
    x_bf = x.astype(jnp.bfloat16)
    # fc_q over d_model: kron(I_T, Wq^T) keeps the (rows, T*D) layout intact.
    q1 = jnp.dot(x_bf, wq_ref[...],
                 preferred_element_type=jnp.float32) + bq_ref[...]
    # fc_patch over seg_num (per batch element): kron(I_TB, Wp) @ rows.
    o1 = jnp.dot(wp_ref[...], q1.astype(jnp.bfloat16),
                 preferred_element_type=jnp.float32) + bp_ref[...]
    # fc_o over d_model (kron(I_T, Wo^T)), ReLU, residual with the raw input.
    o2 = jnp.dot(o1.astype(jnp.bfloat16), wo_ref[...],
                 preferred_element_type=jnp.float32) + bo_ref[...]
    xe = x + jnp.maximum(o2, 0.0)                                  # (rows, T*D) f32
    # encode_layers2: Linear(ts_d -> T2) over ts_d axis as kron(W2^T, I_D),
    # zero-column-padded to a 128-lane multiple so the store is unmasked.
    mg = jnp.dot(xe.astype(jnp.bfloat16), w2_ref[...],
                 preferred_element_type=jnp.float32) + b2_ref[...]
    xenc_ref[0] = xe.astype(xenc_ref.dtype)                        # (rows, T*D)
    merge_ref[0] = mg.astype(merge_ref.dtype)                      # (rows, T2D_pad)


# --------------------------- block-batch chooser ---------------------------
def choose_block_batch(batch, seg, target_rows=128, min_split_rows=64):
    """How many batch elements to stack per grid step.

    Targets ~128 stacked rows (full MXU sublane dim) while preferring >=2
    'parallel' grid steps (both v7x TensorCores) whenever each step still has
    >= min_split_rows rows.  For tiny problems (e.g. B=2, S=8) it folds the
    whole batch into one step: overhead reduction beats a half-empty split.
    """
    best = 1
    for tb in range(1, batch + 1):
        if batch % tb:
            continue
        rows, steps = tb * seg, batch // tb
        if rows >= target_rows and steps >= 2:
            return tb                       # full MXU rows and >=2 steps
        if rows <= 2 * target_rows:
            best = tb                       # largest block that stays modest
    for tb in range(batch, 0, -1):          # else: prefer >=2 decent steps
        if batch % tb == 0 and batch // tb >= 2 and tb * seg >= min_split_rows:
            return tb
    return best


# ------------------------- one-time weight packing -------------------------
def pack_params(Wq, bq, Wp, bp, Wo, bo, W2, b2, ts_d, tb):
    """Kron-expand the per-d_model / per-ts_d / per-seg Linears so every stage
    of the fused kernel is a single MXU matmul in the stacked-row layout.
    Matmul weights are cast to bf16 (native MXU path); biases stay f32."""
    d = Wq.shape[0]
    seg = Wp.shape[0]
    t2 = W2.shape[0]
    td = ts_d * d
    t2d = t2 * d
    t2d_pad = _round_up(t2d, 128)
    rows = tb * seg
    f32, bf16 = jnp.float32, jnp.bfloat16

    eye_t = jnp.eye(ts_d, dtype=f32)
    eye_d = jnp.eye(d, dtype=f32)
    eye_b = jnp.eye(tb, dtype=f32)

    w2_big = jnp.kron(W2.T.astype(f32), eye_d)                     # (T*D, T2*D)
    w2_wide = jnp.zeros((td, t2d_pad), f32).at[:, :t2d].set(w2_big)
    b2_wide = jnp.zeros((1, t2d_pad), f32).at[0, :t2d].set(jnp.repeat(b2.astype(f32), d))

    return {
        "wq_big": jnp.kron(eye_t, Wq.T.astype(f32)).astype(bf16),  # (T*D, T*D)
        "bq_big": jnp.tile(bq.astype(f32), ts_d).reshape(1, td),   # (1, T*D)
        "wp_big": jnp.kron(eye_b, Wp.astype(f32)).astype(bf16),    # (rows, rows)
        # pre-broadcast bp to a full (rows, T*D) slab: plain VPU add in-kernel
        # instead of a 1-useful-lane vreg + lane-broadcast.
        "bp_big": jnp.broadcast_to(
            jnp.tile(bp.astype(f32), tb)[:, None], (rows, td)),    # (rows, T*D)
        "wo_big": jnp.kron(eye_t, Wo.T.astype(f32)).astype(bf16),  # (T*D, T*D)
        "bo_big": jnp.tile(bo.astype(f32), ts_d).reshape(1, td),   # (1, T*D)
        "w2_wide": w2_wide.astype(bf16),                           # (T*D, T2D_pad)
        "b2_wide": b2_wide,                                        # (1, T2D_pad)
    }


# ------------------------------ forward wrapper ------------------------------
def scale_block_forward(x_tuple, params, patch_size, divide):
    x0, merge_x = x_tuple                     # x0 only supplies batch/dim info in the spec
    b, seg, ts_d, d = merge_x.shape
    td = ts_d * d
    t2 = max(1, patch_size // divide)
    t2d = t2 * d
    t2d_pad = params["w2_wide"].shape[1]
    rows = params["wp_big"].shape[0]
    tb = rows // seg
    assert b % tb == 0, "batch must be divisible by the packed block-batch"
    grid_n = b // tb

    x_in = merge_x.reshape(grid_n, rows, td)  # contiguous reshape: free

    # NOTE: the 8 constant weight/bias blocks could be single-buffered
    # (pipeline_mode=pl.Buffered(1)) since their index_map is constant across
    # the grid; left at the default because they total well under 0.5 MiB.
    const = lambda shape: pl.BlockSpec(shape, lambda i: (0,) * len(shape))

    xenc_slab, merge_slab = pl.pallas_call(
        _scale_block_kernel,
        out_shape=(jax.ShapeDtypeStruct((grid_n, rows, td), merge_x.dtype),
                   jax.ShapeDtypeStruct((grid_n, rows, t2d_pad), merge_x.dtype)),
        grid_spec=pltpu.PrefetchScalarGridSpec(
            num_scalar_prefetch=0,
            grid=(grid_n,),
            in_specs=[
                pl.BlockSpec((1, rows, td), lambda i: (i, 0, 0)),  # activations
                const((td, td)),        # wq_big
                const((1, td)),         # bq_big
                const((rows, rows)),    # wp_big
                const((rows, td)),      # bp_big (pre-broadcast)
                const((td, td)),        # wo_big
                const((1, td)),         # bo_big
                const((td, t2d_pad)),   # w2_wide
                const((1, t2d_pad)),    # b2_wide
            ],
            out_specs=[
                pl.BlockSpec((1, rows, td), lambda i: (i, 0, 0)),      # x_enc slab
                pl.BlockSpec((1, rows, t2d_pad), lambda i: (i, 0, 0)),  # merge slab
            ],
        ),
        compiler_params=pltpu.CompilerParams(dimension_semantics=("parallel",)),
    )(x_in, params["wq_big"], params["bq_big"], params["wp_big"], params["bp_big"],
      params["wo_big"], params["bo_big"], params["w2_wide"], params["b2_wide"])

    x_enc = xenc_slab.reshape(b, seg, ts_d, d)          # free contiguous reshape
    if t2d_pad != t2d:
        merge = merge_slab[..., :t2d].reshape(b, seg, t2, d)
    else:
        merge = merge_slab.reshape(b, seg, t2, d)

    # SegMerging (only when patch_size > 1): pad the seg dim to a multiple of
    # `divide`, then a pure contiguous reshape (matches the PyTorch reference,
    # which merges adjacent segments via reshape).
    if patch_size > 1:
        p = merge.shape[1]
        pad_num = 0 if p % divide == 0 else (p // divide + 1) * divide - p
        if pad_num != 0:
            merge = jnp.concatenate(
                [merge, jnp.zeros((b, pad_num, t2, d), merge.dtype)], axis=1)
        merge = merge.reshape(b, merge.shape[1] // divide, t2 * divide, d)
    return x_enc, merge


# --------------------------------- reference ---------------------------------
def ref_forward(merge_x, p, patch_size, divide):
    b, seg, ts_d, d = merge_x.shape
    q_r = jnp.transpose(merge_x, (0, 2, 1, 3)).reshape(b * ts_d, seg, d)
    q1 = q_r @ p["Wq"].T + p["bq_v"]
    o1 = jnp.einsum("os,nsd->nod", p["Wp"], q1) + p["bp_v"][None, :, None]
    o2 = jax.nn.relu(o1 @ p["Wo"].T + p["bo_v"])
    o = q_r + o2
    x_enc = jnp.transpose(o.reshape(b, ts_d, seg, d), (0, 2, 1, 3))
    merge = jnp.einsum("ot,bstd->bsod", p["W2"], x_enc) + p["b2_v"][None, None, :, None]
    merge = merge.reshape(b, seg // divide, merge.shape[2] * divide, d)
    return x_enc, merge


if __name__ == "__main__":
    # module config: dim_hidden=32, input_len(seg_num)=8, patch_size=4, divide=2, ln=False
    dim_hidden, seg_num, patch_size, divide = 32, 8, 4, 2
    batch, ts_d = 2, patch_size          # merge_x ts_d must equal patch_size
    t2 = max(1, patch_size // divide)

    key = jax.random.PRNGKey(0)
    ks = jax.random.split(key, 12)
    x0      = jax.random.normal(ks[0], (batch, seg_num, ts_d, dim_hidden), jnp.float32)
    merge_x = jax.random.normal(ks[1], (batch, seg_num, ts_d, dim_hidden), jnp.float32)

    Wq = jax.random.normal(ks[2], (dim_hidden, dim_hidden), jnp.float32) * 0.1
    bq = jax.random.normal(ks[3], (dim_hidden,), jnp.float32) * 0.1
    Wp = jax.random.normal(ks[4], (seg_num, seg_num), jnp.float32) * 0.1
    bp = jax.random.normal(ks[5], (seg_num,), jnp.float32) * 0.1
    Wo = jax.random.normal(ks[6], (dim_hidden, dim_hidden), jnp.float32) * 0.1
    bo = jax.random.normal(ks[7], (dim_hidden,), jnp.float32) * 0.1
    W2 = jax.random.normal(ks[8], (t2, patch_size), jnp.float32) * 0.1
    b2 = jax.random.normal(ks[9], (t2,), jnp.float32) * 0.1

    tb = choose_block_batch(batch, seg_num)           # -> 2 (whole batch, 1 step)
    params = pack_params(Wq, bq, Wp, bp, Wo, bo, W2, b2, ts_d, tb)
    ref_params = {"Wq": Wq, "bq_v": bq, "Wp": Wp, "bp_v": bp,
                  "Wo": Wo, "bo_v": bo, "W2": W2, "b2_v": b2}

    x_out, merge_out = scale_block_forward((x0, merge_x), params, patch_size, divide)
    jax.block_until_ready(x_out)
    jax.block_until_ready(merge_out)

    x_ref, merge_ref = ref_forward(merge_x, ref_params, patch_size, divide)
    assert x_out.shape == (batch, seg_num, ts_d, dim_hidden)
    assert merge_out.shape == (batch, seg_num // divide, t2 * divide, dim_hidden)
    assert jnp.allclose(x_out, x_ref, atol=2e-2, rtol=2e-2)
    assert jnp.allclose(merge_out, merge_ref, atol=2e-2, rtol=2e-2)

    print("KERNEL_OK")
</pallas_src>

<mosaic_0001>
module attributes {stable_mosaic.version = 11 : i64} {
  func.func @_scale_block_kernel(%arg0: i32, %arg1: memref<1x16x128xf32, #tpu.memory_space<vmem>>, %arg2: memref<128x128xbf16, #tpu.memory_space<vmem>>, %arg3: memref<1x128xf32, #tpu.memory_space<vmem>>, %arg4: memref<16x16xbf16, #tpu.memory_space<vmem>>, %arg5: memref<16x128xf32, #tpu.memory_space<vmem>>, %arg6: memref<128x128xbf16, #tpu.memory_space<vmem>>, %arg7: memref<1x128xf32, #tpu.memory_space<vmem>>, %arg8: memref<128x128xbf16, #tpu.memory_space<vmem>>, %arg9: memref<1x128xf32, #tpu.memory_space<vmem>>, %arg10: memref<1x16x128xf32, #tpu.memory_space<vmem>>, %arg11: memref<1x16x128xf32, #tpu.memory_space<vmem>>) attributes {dimension_semantics = [#tpu.dimension_semantics<parallel>], iteration_bounds = array<i64: 1>, scalar_prefetch = 0 : i64, scratch_operands = 0 : i64, tpu.core_type = #tpu.core_type<tc>, window_params = [{transform_indices = @transform_0, window_bounds = array<i64: 1, 16, 128>}, {pipeline_mode = #tpu.pipeline_mode<synchronous>, transform_indices = @transform_1, window_bounds = array<i64: 128, 128>}, {pipeline_mode = #tpu.pipeline_mode<synchronous>, transform_indices = @transform_2, window_bounds = array<i64: 1, 128>}, {pipeline_mode = #tpu.pipeline_mode<synchronous>, transform_indices = @transform_3, window_bounds = array<i64: 16, 16>}, {pipeline_mode = #tpu.pipeline_mode<synchronous>, transform_indices = @transform_4, window_bounds = array<i64: 16, 128>}, {pipeline_mode = #tpu.pipeline_mode<synchronous>, transform_indices = @transform_5, window_bounds = array<i64: 128, 128>}, {pipeline_mode = #tpu.pipeline_mode<synchronous>, transform_indices = @transform_6, window_bounds = array<i64: 1, 128>}, {pipeline_mode = #tpu.pipeline_mode<synchronous>, transform_indices = @transform_7, window_bounds = array<i64: 128, 128>}, {pipeline_mode = #tpu.pipeline_mode<synchronous>, transform_indices = @transform_8, window_bounds = array<i64: 1, 128>}, {transform_indices = @transform_9, window_bounds = array<i64: 1, 16, 128>}, {transform_indices = @transform_10, window_bounds = array<i64: 1, 16, 128>}]} {
    %c0 = arith.constant 0 : index
    %c0_0 = arith.constant 0 : index
    %c0_1 = arith.constant 0 : index
    %0 = vector.load %arg1[%c0, %c0_0, %c0_1] : memref<1x16x128xf32, #tpu.memory_space<vmem>>, vector<1x16x128xf32>
    %1 = vector.shape_cast %0 : vector<1x16x128xf32> to vector<16x128xf32>
    %2 = arith.truncf %1 : vector<16x128xf32> to vector<16x128xbf16>
    %c0_2 = arith.constant 0 : index
    %c0_3 = arith.constant 0 : index
    %3 = vector.load %arg2[%c0_2, %c0_3] : memref<128x128xbf16, #tpu.memory_space<vmem>>, vector<128x128xbf16>
    %cst = arith.constant dense<0.000000e+00> : vector<16x128xf32>
    %4 = tpu.matmul %2, %3, %cst {dimension_numbers = #tpu.dot_dimension_numbers<[1], [0], [0], [1], [0, 0, 1, 1], [], []>} : vector<16x128xbf16>, vector<128x128xbf16>, vector<16x128xf32> -> vector<16x128xf32>
    %c0_4 = arith.constant 0 : index
    %c0_5 = arith.constant 0 : index
    %5 = vector.load %arg3[%c0_4, %c0_5] : memref<1x128xf32, #tpu.memory_space<vmem>>, vector<1x128xf32>
    %6 = vector.broadcast %5 : vector<1x128xf32> to vector<16x128xf32>
    %7 = arith.addf %4, %6 : vector<16x128xf32>
    %c0_6 = arith.constant 0 : index
    %c0_7 = arith.constant 0 : index
    %8 = vector.load %arg4[%c0_6, %c0_7] : memref<16x16xbf16, #tpu.memory_space<vmem>>, vector<16x16xbf16>
    %9 = arith.truncf %7 : vector<16x128xf32> to vector<16x128xbf16>
    %cst_8 = arith.constant dense<0.000000e+00> : vector<16x128xf32>
    %10 = tpu.matmul %8, %9, %cst_8 {dimension_numbers = #tpu.dot_dimension_numbers<[1], [0], [0], [1], [0, 0, 1, 1], [], []>} : vector<16x16xbf16>, vector<16x128xbf16>, vector<16x128xf32> -> vector<16x128xf32>
    %c0_9 = arith.constant 0 : index
    %c0_10 = arith.constant 0 : index
    %11 = vector.load %arg5[%c0_9, %c0_10] : memref<16x128xf32, #tpu.memory_space<vmem>>, vector<16x128xf32>
    %12 = arith.addf %10, %11 : vector<16x128xf32>
    %13 = arith.truncf %12 : vector<16x128xf32> to vector<16x128xbf16>
    %c0_11 = arith.constant 0 : index
    %c0_12 = arith.constant 0 : index
    %14 = vector.load %arg6[%c0_11, %c0_12] : memref<128x128xbf16, #tpu.memory_space<vmem>>, vector<128x128xbf16>
    %cst_13 = arith.constant dense<0.000000e+00> : vector<16x128xf32>
    %15 = tpu.matmul %13, %14, %cst_13 {dimension_numbers = #tpu.dot_dimension_numbers<[1], [0], [0], [1], [0, 0, 1, 1], [], []>} : vector<16x128xbf16>, vector<128x128xbf16>, vector<16x128xf32> -> vector<16x128xf32>
    %c0_14 = arith.constant 0 : index
    %c0_15 = arith.constant 0 : index
    %16 = vector.load %arg7[%c0_14, %c0_15] : memref<1x128xf32, #tpu.memory_space<vmem>>, vector<1x128xf32>
    %17 = vector.broadcast %16 : vector<1x128xf32> to vector<16x128xf32>
    %18 = arith.addf %15, %17 : vector<16x128xf32>
    %cst_16 = arith.constant 0.000000e+00 : f32
    %19 = vector.broadcast %cst_16 : f32 to vector<16x128xf32>
    %20 = arith.maximumf %18, %19 : vector<16x128xf32>
    %21 = arith.addf %1, %20 : vector<16x128xf32>
    %22 = arith.truncf %21 : vector<16x128xf32> to vector<16x128xbf16>
    %c0_17 = arith.constant 0 : index
    %c0_18 = arith.constant 0 : index
    %23 = vector.load %arg8[%c0_17, %c0_18] : memref<128x128xbf16, #tpu.memory_space<vmem>>, vector<128x128xbf16>
    %cst_19 = arith.constant dense<0.000000e+00> : vector<16x128xf32>
    %24 = tpu.matmul %22, %23, %cst_19 {dimension_numbers = #tpu.dot_dimension_numbers<[1], [0], [0], [1], [0, 0, 1, 1], [], []>} : vector<16x128xbf16>, vector<128x128xbf16>, vector<16x128xf32> -> vector<16x128xf32>
    %c0_20 = arith.constant 0 : index
    %c0_21 = arith.constant 0 : index
    %25 = vector.load %arg9[%c0_20, %c0_21] : memref<1x128xf32, #tpu.memory_space<vmem>>, vector<1x128xf32>
    %26 = vector.broadcast %25 : vector<1x128xf32> to vector<16x128xf32>
    %27 = arith.addf %24, %26 : vector<16x128xf32>
    %c0_22 = arith.constant 0 : index
    %c0_23 = arith.constant 0 : index
    %c0_24 = arith.constant 0 : index
    %28 = vector.load %arg10[%c0_22, %c0_23, %c0_24] : memref<1x16x128xf32, #tpu.memory_space<vmem>>, vector<1x16x128xf32>
    %29 = vector.shape_cast %28 : vector<1x16x128xf32> to vector<16x128xf32>
    %30 = vector.shape_cast %21 : vector<16x128xf32> to vector<1x16x128xf32>
    tpu.vector_store %arg10[%c0_22, %c0_23, %c0_24], %30 {strides = array<i32>} : memref<1x16x128xf32, #tpu.memory_space<vmem>>, vector<1x16x128xf32>,
    %c0_25 = arith.constant 0 : index
    %c0_26 = arith.constant 0 : index
    %c0_27 = arith.constant 0 : index
    %31 = vector.load %arg11[%c0_25, %c0_26, %c0_27] : memref<1x16x128xf32, #tpu.memory_space<vmem>>, vector<1x16x128xf32>
    %32 = vector.shape_cast %31 : vector<1x16x128xf32> to vector<16x128xf32>
    %33 = vector.shape_cast %27 : vector<16x128xf32> to vector<1x16x128xf32>
    tpu.vector_store %arg11[%c0_25, %c0_26, %c0_27], %33 {strides = array<i32>} : memref<1x16x128xf32, #tpu.memory_space<vmem>>, vector<1x16x128xf32>,
    return
  }
  func.func @transform_0(%arg0: i32) -> (i32, i32, i32) {
    %c0_i32 = arith.constant 0 : i32
    %c0_i32_0 = arith.constant 0 : i32
    %c0_i32_1 = arith.constant 0 : i32
    return %arg0, %c0_i32, %c0_i32_0 : i32, i32, i32
  }
  func.func @transform_1(%arg0: i32) -> (i32, i32) {
    %c0_i32 = arith.constant 0 : i32
    %c0_i32_0 = arith.constant 0 : i32
    %c0_i32_1 = arith.constant 0 : i32
    return %c0_i32, %c0_i32_0 : i32, i32
  }
  func.func @transform_2(%arg0: i32) -> (i32, i32) {
    %c0_i32 = arith.constant 0 : i32
    %c0_i32_0 = arith.constant 0 : i32
    %c0_i32_1 = arith.constant 0 : i32
    return %c0_i32, %c0_i32_0 : i32, i32
  }
  func.func @transform_3(%arg0: i32) -> (i32, i32) {
    %c0_i32 = arith.constant 0 : i32
    %c0_i32_0 = arith.constant 0 : i32
    %c0_i32_1 = arith.constant 0 : i32
    return %c0_i32, %c0_i32_0 : i32, i32
  }
  func.func @transform_4(%arg0: i32) -> (i32, i32) {
    %c0_i32 = arith.constant 0 : i32
    %c0_i32_0 = arith.constant 0 : i32
    %c0_i32_1 = arith.constant 0 : i32
    return %c0_i32, %c0_i32_0 : i32, i32
  }
  func.func @transform_5(%arg0: i32) -> (i32, i32) {
    %c0_i32 = arith.constant 0 : i32
    %c0_i32_0 = arith.constant 0 : i32
    %c0_i32_1 = arith.constant 0 : i32
    return %c0_i32, %c0_i32_0 : i32, i32
  }
  func.func @transform_6(%arg0: i32) -> (i32, i32) {
    %c0_i32 = arith.constant 0 : i32
    %c0_i32_0 = arith.constant 0 : i32
    %c0_i32_1 = arith.constant 0 : i32
    return %c0_i32, %c0_i32_0 : i32, i32
  }
  func.func @transform_7(%arg0: i32) -> (i32, i32) {
    %c0_i32 = arith.constant 0 : i32
    %c0_i32_0 = arith.constant 0 : i32
    %c0_i32_1 = arith.constant 0 : i32
    return %c0_i32, %c0_i32_0 : i32, i32
  }
  func.func @transform_8(%arg0: i32) -> (i32, i32) {
    %c0_i32 = arith.constant 0 : i32
    %c0_i32_0 = arith.constant 0 : i32
    %c0_i32_1 = arith.constant 0 : i32
    return %c0_i32, %c0_i32_0 : i32, i32
  }
  func.func @transform_9(%arg0: i32) -> (i32, i32, i32) {
    %c0_i32 = arith.constant 0 : i32
    %c0_i32_0 = arith.constant 0 : i32
    %c0_i32_1 = arith.constant 0 : i32
    return %arg0, %c0_i32, %c0_i32_0 : i32, i32, i32
  }
  func.func @transform_10(%arg0: i32) -> (i32, i32, i32) {
    %c0_i32 = arith.constant 0 : i32
    %c0_i32_0 = arith.constant 0 : i32
    %c0_i32_1 = arith.constant 0 : i32
    return %arg0, %c0_i32, %c0_i32_0 : i32, i32, i32
  }
}

</mosaic_0001>

<llo_original>
// kernel: tpu_custom_call.1
$region0: #{tpu_custom_call.1}
  #allocation0 [shape = 'u32[]', space=smem, size = 0x4, offset = 0x4, fixed_abs, tag = 'smem constant byte address 0x4 - core index']
  #allocation1 [shape = 'u32[144,128]{1,0:T(1,128)}', space=vmem, size = 0x12000, scoped, tag = 'internal scratch']
  %s0 = inlined_call_operand.hbm [shape: f32[1,16,128], index: 0, kind: input, shape index: {}]
  %s1 = inlined_call_operand.hbm [shape: bf16[128,128], index: 1, kind: input, shape index: {}]
  %s2 = inlined_call_operand.vmem [shape: f32[1,128], index: 2, kind: input, shape index: {}]
  %s3 = inlined_call_operand.hbm [shape: bf16[16,16], index: 3, kind: input, shape index: {}]
  %s4 = inlined_call_operand.hbm [shape: f32[16,128], index: 4, kind: input, shape index: {}]
  %s5 = inlined_call_operand.hbm [shape: bf16[128,128], index: 5, kind: input, shape index: {}]
  %s6 = inlined_call_operand.vmem [shape: f32[1,128], index: 6, kind: input, shape index: {}]
  %s7 = inlined_call_operand.hbm [shape: bf16[128,128], index: 7, kind: input, shape index: {}]
  %s8 = inlined_call_operand.vmem [shape: f32[1,128], index: 8, kind: input, shape index: {}]
  %s9 = inlined_call_operand.hbm [shape: f32[1,16,128], index: 9, kind: output, shape index: {0}]
  %s10 = inlined_call_operand.hbm [shape: f32[1,16,128], index: 10, kind: output, shape index: {1}]
  %11 = xla_tuple %s9, %s10
  %s12 = sld [smem:[#allocation0]]
  $region78: #{tpu_custom_call.1} parent=0
    _
  %s14 = ssub.s32 1, %s12
  %s15 = scalar_select 0, %s14, %s12
  $region1: #{tpu_custom_call.1} parent=0
    #allocation2 [shape = 'u8[8192]{0}', space=vmem, size = 0x2000, scoped, tag = 'input window, operand 0, single buffered']
    #allocation3 [shape = 's32[1]{0}', space=sflag, size = 0x4, scoped, tag = 'scoped memory for tpu_custom_call.1']
    #allocation4 [shape = 's32[1]{0}', space=sflag, size = 0x4, scoped, tag = 'scoped memory for tpu_custom_call.1']
    #allocation5 [shape = 'u8[32768]{0}', space=vmem, size = 0x8000, scoped, tag = 'input window, operand 1, single buffered']
    #allocation6 [shape = 's32[1]{0}', space=sflag, size = 0x4, scoped, tag = 'scoped memory for tpu_custom_call.1']
    #allocation7 [shape = 'u8[4096]{0}', space=vmem, size = 0x1000, scoped, tag = 'input window, operand 3, single buffered']
    #allocation8 [shape = 'u8[8192]{0}', space=vmem, size = 0x2000, scoped, tag = 'input window, operand 4, single buffered']
    #allocation9 [shape = 's32[1]{0}', space=sflag, size = 0x4, scoped, tag = 'scoped memory for tpu_custom_call.1']
    #allocation10 [shape = 'u8[32768]{0}', space=vmem, size = 0x8000, scoped, tag = 'input window, operand 5, single buffered']
    #allocation11 [shape = 'u8[32768]{0}', space=vmem, size = 0x8000, scoped, tag = 'input window, operand 7, single buffered']
    #allocation12 [shape = 's32[1]{0}', space=sflag, size = 0x4, scoped, tag = 'scoped memory for tpu_custom_call.1']
    #allocation13 [shape = 'u8[8192]{0}', space=vmem, size = 0x2000, scoped, tag = 'output window, operand 0, single buffered']
    #allocation14 [shape = 'u8[8192]{0}', space=vmem, size = 0x2000, scoped, tag = 'output window, operand 1, single buffered']
    #allocation15 [shape = 's32[1]{0}', space=sflag, size = 0x4, scoped, tag = 'scoped memory for tpu_custom_call.1']
    %16 = vsyncpa [#allocation3], 0
    %17 = vsyncpa [#allocation6], 0
    %18 = vsyncpa [#allocation9], 0
    %19 = vsyncpa [#allocation12], 0
    %20 = vsyncpa [#allocation4], 0
    %21 = vsyncpa [#allocation15], 0
    // Predicated region
    $region2: #{tpu_custom_call.1} parent=1 // pred_check
      _
    $region3: #{tpu_custom_call.1} parent=1 // pred_check_branch
      %23 = sbr.rel (0) target = $region5
    $region4: #{tpu_custom_call.1} parent=1 // pred_region
      %s25 = ssub.s32 256, 256
      %26 = vsyncadd [#allocation3], %s25
      %s27 = sshll.u32 [#allocation2], 4
      %s28 = int_to_ptr.vmem [resolvable:$true] %s27
      %33 = dma.hbm_to_vmem [thread:$0]  %s0, 256, %s28, [#allocation3], 128, 128, 8
    $region5: #{tpu_custom_call.1} parent=1 // pred_fallthru
      _
    // Predicated region
    $region6: #{tpu_custom_call.1} parent=1 // pred_check
      _
    $region7: #{tpu_custom_call.1} parent=1 // pred_check_branch
      %35 = sbr.rel (0) target = $region9
    $region8: #{tpu_custom_call.1} parent=1 // pred_region
      %s37 = ssub.s32 1024, 1024
      %38 = vsyncadd [#allocation6], %s37
      %s39 = sshll.u32 [#allocation5], 4
      %s40 = int_to_ptr.vmem [resolvable:$true] %s39
      %45 = dma.hbm_to_vmem [thread:$0]  %s1, 1024, %s40, [#allocation6], 64, 64, 4
    $region9: #{tpu_custom_call.1} parent=1 // pred_fallthru
      _
    // Predicated region
    $region10: #{tpu_custom_call.1} parent=1 // pred_check
      _
    $region11: #{tpu_custom_call.1} parent=1 // pred_check_branch
      %47 = sbr.rel (0) target = $region13
    $region12: #{tpu_custom_call.1} parent=1 // pred_region
      _
    $region13: #{tpu_custom_call.1} parent=1 // pred_fallthru
      _
    // Predicated region
    $region14: #{tpu_custom_call.1} parent=1 // pred_check
      _
    $region15: #{tpu_custom_call.1} parent=1 // pred_check_branch
      %49 = sbr.rel (0) target = $region17
    $region16: #{tpu_custom_call.1} parent=1 // pred_region
      %s51 = ssub.s32 128, 128
      %52 = vsyncadd [#allocation6], %s51
      %s53 = sshll.u32 [#allocation7], 4
      %s54 = int_to_ptr.vmem [resolvable:$true] %s53
      %59 = dma.hbm_to_vmem [thread:$0]  %s3, 128, %s54, [#allocation6], 64, 64, 4
    $region17: #{tpu_custom_call.1} parent=1 // pred_fallthru
      _
    // Predicated region
    $region18: #{tpu_custom_call.1} parent=1 // pred_check
      _
    $region19: #{tpu_custom_call.1} parent=1 // pred_check_branch
      %61 = sbr.rel (0) target = $region21
    $region20: #{tpu_custom_call.1} parent=1 // pred_region
      %s63 = ssub.s32 256, 256
      %64 = vsyncadd [#allocation9], %s63
      %s65 = sshll.u32 [#allocation8], 4
      %s66 = int_to_ptr.vmem [resolvable:$true] %s65
      %71 = dma.hbm_to_vmem [thread:$0]  %s4, 256, %s66, [#allocation9], 128, 128, 8
    $region21: #{tpu_custom_call.1} parent=1 // pred_fallthru
      _
    // Predicated region
    $region22: #{tpu_custom_call.1} parent=1 // pred_check
      _
    $region23: #{tpu_custom_call.1} parent=1 // pred_check_branch
      %73 = sbr.rel (0) target = $region25
    $region24: #{tpu_custom_call.1} parent=1 // pred_region
      %s75 = ssub.s32 1024, 1024
      %76 = vsyncadd [#allocation9], %s75
      %s77 = sshll.u32 [#allocation10], 4
      %s78 = int_to_ptr.vmem [resolvable:$true] %s77
      %83 = dma.hbm_to_vmem [thread:$0]  %s5, 1024, %s78, [#allocation9], 64, 64, 4
    $region25: #{tpu_custom_call.1} parent=1 // pred_fallthru
      _
    // Predicated region
    $region26: #{tpu_custom_call.1} parent=1 // pred_check
      _
    $region27: #{tpu_custom_call.1} parent=1 // pred_check_branch
      %85 = sbr.rel (0) target = $region29
    $region28: #{tpu_custom_call.1} parent=1 // pred_region
      _
    $region29: #{tpu_custom_call.1} parent=1 // pred_fallthru
      _
    // Predicated region
    $region30: #{tpu_custom_call.1} parent=1 // pred_check
      _
    $region31: #{tpu_custom_call.1} parent=1 // pred_check_branch
      %87 = sbr.rel (0) target = $region33
    $region32: #{tpu_custom_call.1} parent=1 // pred_region
      %s89 = ssub.s32 1024, 1024
      %90 = vsyncadd [#allocation12], %s89
      %s91 = sshll.u32 [#allocation11], 4
      %s92 = int_to_ptr.vmem [resolvable:$true] %s91
      %97 = dma.hbm_to_vmem [thread:$0]  %s7, 1024, %s92, [#allocation12], 64, 64, 4
    $region33: #{tpu_custom_call.1} parent=1 // pred_fallthru
      _
    // Predicated region
    $region34: #{tpu_custom_call.1} parent=1 // pred_check
      _
    $region35: #{tpu_custom_call.1} parent=1 // pred_check_branch
      %99 = sbr.rel (0) target = $region37
    $region36: #{tpu_custom_call.1} parent=1 // pred_region
      _
    $region37: #{tpu_custom_call.1} parent=1 // pred_fallthru
      _
    // Predicated region
    $region38: #{tpu_custom_call.1} parent=1 // pred_check
      _
    $region39: #{tpu_custom_call.1} parent=1 // pred_check_branch
      %101 = sbr.rel (0) target = $region41
    $region40: #{tpu_custom_call.1} parent=1 // pred_region
      %102 = dma.done [#allocation3], 256
    $region41: #{tpu_custom_call.1} parent=1 // pred_fallthru
      _
    // Predicated region
    $region42: #{tpu_custom_call.1} parent=1 // pred_check
      _
    $region43: #{tpu_custom_call.1} parent=1 // pred_check_branch
      %104 = sbr.rel (0) target = $region45
    $region44: #{tpu_custom_call.1} parent=1 // pred_region
      %105 = dma.done [#allocation6], 1024
    $region45: #{tpu_custom_call.1} parent=1 // pred_fallthru
      _
    // Predicated region
    $region46: #{tpu_custom_call.1} parent=1 // pred_check
      _
    $region47: #{tpu_custom_call.1} parent=1 // pred_check_branch
      %107 = sbr.rel (0) target = $region49
    $region48: #{tpu_custom_call.1} parent=1 // pred_region
      %108 = dma.done [#allocation6], 128
    $region49: #{tpu_custom_call.1} parent=1 // pred_fallthru
      _
    // Predicated region
    $region50: #{tpu_custom_call.1} parent=1 // pred_check
      _
    $region51: #{tpu_custom_call.1} parent=1 // pred_check_branch
      %110 = sbr.rel (0) target = $region53
    $region52: #{tpu_custom_call.1} parent=1 // pred_region
      %111 = dma.done [#allocation9], 256
    $region53: #{tpu_custom_call.1} parent=1 // pred_fallthru
      _
    // Predicated region
    $region54: #{tpu_custom_call.1} parent=1 // pred_check
      _
    $region55: #{tpu_custom_call.1} parent=1 // pred_check_branch
      %113 = sbr.rel (0) target = $region57
    $region56: #{tpu_custom_call.1} parent=1 // pred_region
      %114 = dma.done [#allocation9], 1024
    $region57: #{tpu_custom_call.1} parent=1 // pred_fallthru
      _
    // Predicated region
    $region58: #{tpu_custom_call.1} parent=1 // pred_check
      _
    $region59: #{tpu_custom_call.1} parent=1 // pred_check_branch
      %116 = sbr.rel (0) target = $region61
    $region60: #{tpu_custom_call.1} parent=1 // pred_region
      %117 = dma.done [#allocation12], 1024
    $region61: #{tpu_custom_call.1} parent=1 // pred_fallthru
      _
    %v119 = vld [vmem:[#allocation2] sm:$0xff]
    %v120 = vld [vmem:[#allocation2 + $0x8] sm:$0xff]
    %v121 = vpack.c.bf16 %v120, %v119
    %v122 = vld [vmem:[#allocation5] sm:$0xf]
    %v123 = vld [vmem:[#allocation5 + $0x4] sm:$0xf]
    %v124 = vld [vmem:[#allocation5 + $0x8] sm:$0xf]
    %v125 = vld [vmem:[#allocation5 + $0xc] sm:$0xf]
    %v126 = vld [vmem:[#allocation5 + $0x10] sm:$0xf]
    %v127 = vld [vmem:[#allocation5 + $0x14] sm:$0xf]
    %v128 = vld [vmem:[#allocation5 + $0x18] sm:$0xf]
    %v129 = vld [vmem:[#allocation5 + $0x1c] sm:$0xf]
    %v130 = vld [vmem:[#allocation5 + $0x20] sm:$0xf]
    %v131 = vld [vmem:[#allocation5 + $0x24] sm:$0xf]
    %v132 = vld [vmem:[#allocation5 + $0x28] sm:$0xf]
    %v133 = vld [vmem:[#allocation5 + $0x2c] sm:$0xf]
    %v134 = vld [vmem:[#allocation5 + $0x30] sm:$0xf]
    %v135 = vld [vmem:[#allocation5 + $0x34] sm:$0xf]
    %v136 = vld [vmem:[#allocation5 + $0x38] sm:$0xf]
    %v137 = vld [vmem:[#allocation5 + $0x3c] sm:$0xf]
    %v138 = vld [vmem:[%s2] sm:$0x1]
    %v140 = vlaneseq
    %v141 = vshrl.u32 %v140, 7
    %v142 = vsub.s32 0, %v141
    %v143 = vrot.slane %v138, %v142
    %v161 = vunpack.c.l.b16 %v122
    %v162 = vunpack.c.l.b16 %v123
    %v163 = vunpack.c.l.b16 %v124
    %v164 = vunpack.c.l.b16 %v125
    %v165 = vunpack.c.l.b16 %v126
    %v166 = vunpack.c.l.b16 %v127
    %v167 = vunpack.c.l.b16 %v128
    %v168 = vunpack.c.l.b16 %v129
    %v169 = vunpack.c.l.b16 %v130
    %v170 = vunpack.c.l.b16 %v131
    %v171 = vunpack.c.l.b16 %v132
    %v172 = vunpack.c.l.b16 %v133
    %v173 = vunpack.c.l.b16 %v134
    %v174 = vunpack.c.l.b16 %v135
    %v175 = vunpack.c.l.b16 %v136
    %v176 = vunpack.c.l.b16 %v137
    %v177 = vpack.c.b16 %v162, %v161
    %v178 = vpack.c.b16 %v164, %v163
    %v179 = vpack.c.b16 %v166, %v165
    %v180 = vpack.c.b16 %v168, %v167
    %v181 = vpack.c.b16 %v170, %v169
    %v182 = vpack.c.b16 %v172, %v171
    %v183 = vpack.c.b16 %v174, %v173
    %v184 = vpack.c.b16 %v176, %v175
    %193 = vmatprep.subr.bf16.mxu0 0
    %194 = vmatpush1.bf16.msra.mxu0 %v184
    %195 = vmatprep.subr.bf16.mxu0 0
    %196 = vmatpush1.bf16.msra.mxu0 %v183
    %197 = vmatprep.subr.bf16.mxu0 0
    %198 = vmatpush1.bf16.msra.mxu0 %v182
    %199 = vmatprep.subr.bf16.mxu0 0
    %200 = vmatpush1.bf16.msra.mxu0 %v181
    %201 = vmatprep.subr.bf16.mxu0 0
    %202 = vmatpush1.bf16.msra.mxu0 %v180
    %203 = vmatprep.subr.bf16.mxu0 0
    %204 = vmatpush1.bf16.msra.mxu0 %v179
    %205 = vmatprep.subr.bf16.mxu0 0
    %206 = vmatpush1.bf16.msra.mxu0 %v178
    %207 = vmatprep.subr.bf16.mxu0 0
    %208 = vmatpush1.bf16.msra.mxu0 %v177
    %209 = vmatprep.subr.bf16.mxu0 0
    %210 = vmatpush2.bf16.msra.mxu0 0
    %211 = vmatprep.subr.bf16.mxu0 0
    %212 = vmatpush2.bf16.msra.mxu0 0
    %213 = vmatprep.subr.bf16.mxu0 0
    %214 = vmatpush2.bf16.msra.mxu0 0
    %215 = vmatprep.subr.bf16.mxu0 0
    %216 = vmatpush2.bf16.msra.mxu0 0
    %217 = vmatprep.subr.bf16.mxu0 0
    %218 = vmatpush2.bf16.msra.mxu0 0
    %219 = vmatprep.subr.bf16.mxu0 0
    %220 = vmatpush2.bf16.msra.mxu0 0
    %221 = vmatprep.subr.bf16.mxu0 0
    %222 = vmatpush2.bf16.msra.mxu0 0
    %223 = vmatprep.subr.bf16.mxu0 0
    %224 = vmatpush2.bf16.msra.mxu0 0
    %225 = vmatprep.mubr.bf16.mxu0 0
    %226 = vmatmul.mubr.bf16.gmra.mxu0 %v121
    %v227 = vpop.f32.mrf.mxu0
    %v228 = vadd.f32 %v143, %v227
    %v229 = vpop.f32.mrf.mxu0
    %v230 = vpop.f32.mrf.mxu0
    %v231 = vadd.f32 %v143, %v230
    %v232 = vpop.f32.mrf.mxu0
    %233 = vdwg.mxu0
    %v234 = vld [vmem:[#allocation7] sm:$0xf]
    %v235 = vld [vmem:[#allocation7 + $0x4] sm:$0xf]
    %v236 = vpack.c.bf16 %v231, %v228
    %v237 = vld [vmem:[#allocation8] sm:$0xff]
    %v238 = vld [vmem:[#allocation8 + $0x8] sm:$0xff]
    %v241 = vunpack.c.l.b16 %v234
    %v242 = vunpack.c.l.b16 %v235
    %v243 = vpack.c.b16 %v242, %v241
    %vm244 = vcmask 130048
    %v246 = vsel %vm244, %v243, 0
    %248 = vmatprep.subr.bf16.mxu0 0
    %249 = vmatpush1.bf16.msra.mxu0 0
    %250 = vmatprep.subr.bf16.mxu0 0
    %251 = vmatpush1.bf16.msra.mxu0 0
    %252 = vmatprep.subr.bf16.mxu0 0
    %253 = vmatpush1.bf16.msra.mxu0 0
    %254 = vmatprep.subr.bf16.mxu0 0
    %255 = vmatpush1.bf16.msra.mxu0 0
    %256 = vmatprep.subr.bf16.mxu0 0
    %257 = vmatpush1.bf16.msra.mxu0 0
    %258 = vmatprep.subr.bf16.mxu0 0
    %259 = vmatpush1.bf16.msra.mxu0 0
    %260 = vmatprep.subr.bf16.mxu0 0
    %261 = vmatpush1.bf16.msra.mxu0 0
    %262 = vmatprep.subr.bf16.mxu0 0
    %263 = vmatpush1.bf16.msra.mxu0 %v236
    %264 = vmatprep.subr.bf16.mxu0 0
    %265 = vmatpush2.bf16.msra.mxu0 0
    %266 = vmatprep.subr.bf16.mxu0 0
    %267 = vmatpush2.bf16.msra.mxu0 0
    %268 = vmatprep.subr.bf16.mxu0 0
    %269 = vmatpush2.bf16.msra.mxu0 0
    %270 = vmatprep.subr.bf16.mxu0 0
    %271 = vmatpush2.bf16.msra.mxu0 0
    %272 = vmatprep.subr.bf16.mxu0 0
    %273 = vmatpush2.bf16.msra.mxu0 0
    %274 = vmatprep.subr.bf16.mxu0 0
    %275 = vmatpush2.bf16.msra.mxu0 0
    %276 = vmatprep.subr.bf16.mxu0 0
    %277 = vmatpush2.bf16.msra.mxu0 0
    %278 = vmatprep.subr.bf16.mxu0 0
    %279 = vmatpush2.bf16.msra.mxu0 0
    %280 = vmatprep.mubr.bf16.mxu0 0
    %281 = vmatmul.mubr.bf16.gmra.mxu0 %v246
    %v282 = vpop.f32.mrf.mxu0
    %v283 = vadd.f32 %v237, %v282
    %v284 = vpop.f32.mrf.mxu0
    %v285 = vpop.f32.mrf.mxu0
    %v286 = vadd.f32 %v238, %v285
    %v287 = vpop.f32.mrf.mxu0
    %288 = vdwg.mxu0
    %v289 = vpack.c.bf16 %v286, %v283
    %v290 = vld [vmem:[#allocation10] sm:$0xf]
    %v291 = vld [vmem:[#allocation10 + $0x4] sm:$0xf]
    %v292 = vld [vmem:[#allocation10 + $0x8] sm:$0xf]
    %v293 = vld [vmem:[#allocation10 + $0xc] sm:$0xf]
    %v294 = vld [vmem:[#allocation10 + $0x10] sm:$0xf]
    %v295 = vld [vmem:[#allocation10 + $0x14] sm:$0xf]
    %v296 = vld [vmem:[#allocation10 + $0x18] sm:$0xf]
    %v297 = vld [vmem:[#allocation10 + $0x1c] sm:$0xf]
    %v298 = vld [vmem:[#allocation10 + $0x20] sm:$0xf]
    %v299 = vld [vmem:[#allocation10 + $0x24] sm:$0xf]
    %v300 = vld [vmem:[#allocation10 + $0x28] sm:$0xf]
    %v301 = vld [vmem:[#allocation10 + $0x2c] sm:$0xf]
    %v302 = vld [vmem:[#allocation10 + $0x30] sm:$0xf]
    %v303 = vld [vmem:[#allocation10 + $0x34] sm:$0xf]
    %v304 = vld [vmem:[#allocation10 + $0x38] sm:$0xf]
    %v305 = vld [vmem:[#allocation10 + $0x3c] sm:$0xf]
    %v306 = vld [vmem:[%s6] sm:$0x1]
    %v308 = vlaneseq
    %v309 = vshrl.u32 %v308, 7
    %v310 = vsub.s32 0, %v309
    %v311 = vrot.slane %v306, %v310
    %v329 = vunpack.c.l.b16 %v290
    %v330 = vunpack.c.l.b16 %v291
    %v331 = vunpack.c.l.b16 %v292
    %v332 = vunpack.c.l.b16 %v293
    %v333 = vunpack.c.l.b16 %v294
    %v334 = vunpack.c.l.b16 %v295
    %v335 = vunpack.c.l.b16 %v296
    %v336 = vunpack.c.l.b16 %v297
    %v337 = vunpack.c.l.b16 %v298
    %v338 = vunpack.c.l.b16 %v299
    %v339 = vunpack.c.l.b16 %v300
    %v340 = vunpack.c.l.b16 %v301
    %v341 = vunpack.c.l.b16 %v302
    %v342 = vunpack.c.l.b16 %v303
    %v343 = vunpack.c.l.b16 %v304
    %v344 = vunpack.c.l.b16 %v305
    %v345 = vpack.c.b16 %v330, %v329
    %v346 = vpack.c.b16 %v332, %v331
    %v347 = vpack.c.b16 %v334, %v333
    %v348 = vpack.c.b16 %v336, %v335
    %v349 = vpack.c.b16 %v338, %v337
    %v350 = vpack.c.b16 %v340, %v339
    %v351 = vpack.c.b16 %v342, %v341
    %v352 = vpack.c.b16 %v344, %v343
    %361 = vmatprep.subr.bf16.mxu0 0
    %362 = vmatpush1.bf16.msra.mxu0 %v352
    %363 = vmatprep.subr.bf16.mxu0 0
    %364 = vmatpush1.bf16.msra.mxu0 %v351
    %365 = vmatprep.subr.bf16.mxu0 0
    %366 = vmatpush1.bf16.msra.mxu0 %v350
    %367 = vmatprep.subr.bf16.mxu0 0
    %368 = vmatpush1.bf16.msra.mxu0 %v349
    %369 = vmatprep.subr.bf16.mxu0 0
    %370 = vmatpush1.bf16.msra.mxu0 %v348
    %371 = vmatprep.subr.bf16.mxu0 0
    %372 = vmatpush1.bf16.msra.mxu0 %v347
    %373 = vmatprep.subr.bf16.mxu0 0
    %374 = vmatpush1.bf16.msra.mxu0 %v346
    %375 = vmatprep.subr.bf16.mxu0 0
    %376 = vmatpush1.bf16.msra.mxu0 %v345
    %377 = vmatprep.subr.bf16.mxu0 0
    %378 = vmatpush2.bf16.msra.mxu0 0
    %379 = vmatprep.subr.bf16.mxu0 0
    %380 = vmatpush2.bf16.msra.mxu0 0
    %381 = vmatprep.subr.bf16.mxu0 0
    %382 = vmatpush2.bf16.msra.mxu0 0
    %383 = vmatprep.subr.bf16.mxu0 0
    %384 = vmatpush2.bf16.msra.mxu0 0
    %385 = vmatprep.subr.bf16.mxu0 0
    %386 = vmatpush2.bf16.msra.mxu0 0
    %387 = vmatprep.subr.bf16.mxu0 0
    %388 = vmatpush2.bf16.msra.mxu0 0
    %389 = vmatprep.subr.bf16.mxu0 0
    %390 = vmatpush2.bf16.msra.mxu0 0
    %391 = vmatprep.subr.bf16.mxu0 0
    %392 = vmatpush2.bf16.msra.mxu0 0
    %393 = vmatprep.mubr.bf16.mxu0 0
    %394 = vmatmul.mubr.bf16.gmra.mxu0 %v289
    %v395 = vpop.f32.mrf.mxu0
    %v396 = vadd.f32 %v311, %v395
    %v397 = vpop.f32.mrf.mxu0
    %v398 = vpop.f32.mrf.mxu0
    %v399 = vadd.f32 %v311, %v398
    %v400 = vpop.f32.mrf.mxu0
    %401 = vdwg.mxu0
    %v402 = vmax.f32 %v396, 0.0
    %v403 = vmax.f32 %v399, 0.0
    %v404 = vadd.f32 %v119, %v402
    %v405 = vadd.f32 %v120, %v403
    %v406 = vpack.c.bf16 %v405, %v404
    %v407 = vld [vmem:[#allocation11] sm:$0xf]
    %v408 = vld [vmem:[#allocation11 + $0x4] sm:$0xf]
    %v409 = vld [vmem:[#allocation11 + $0x8] sm:$0xf]
    %v410 = vld [vmem:[#allocation11 + $0xc] sm:$0xf]
    %v411 = vld [vmem:[#allocation11 + $0x10] sm:$0xf]
    %v412 = vld [vmem:[#allocation11 + $0x14] sm:$0xf]
    %v413 = vld [vmem:[#allocation11 + $0x18] sm:$0xf]
    %v414 = vld [vmem:[#allocation11 + $0x1c] sm:$0xf]
    %v415 = vld [vmem:[#allocation11 + $0x20] sm:$0xf]
    %v416 = vld [vmem:[#allocation11 + $0x24] sm:$0xf]
    %v417 = vld [vmem:[#allocation11 + $0x28] sm:$0xf]
    %v418 = vld [vmem:[#allocation11 + $0x2c] sm:$0xf]
    %v419 = vld [vmem:[#allocation11 + $0x30] sm:$0xf]
    %v420 = vld [vmem:[#allocation11 + $0x34] sm:$0xf]
    %v421 = vld [vmem:[#allocation11 + $0x38] sm:$0xf]
    %v422 = vld [vmem:[#allocation11 + $0x3c] sm:$0xf]
    %v423 = vld [vmem:[%s8] sm:$0x1]
    %v425 = vlaneseq
    %v426 = vshrl.u32 %v425, 7
    %v427 = vsub.s32 0, %v426
    %v428 = vrot.slane %v423, %v427
    %v446 = vunpack.c.l.b16 %v407
    %v447 = vunpack.c.l.b16 %v408
    %v448 = vunpack.c.l.b16 %v409
    %v449 = vunpack.c.l.b16 %v410
    %v450 = vunpack.c.l.b16 %v411
    %v451 = vunpack.c.l.b16 %v412
    %v452 = vunpack.c.l.b16 %v413
    %v453 = vunpack.c.l.b16 %v414
    %v454 = vunpack.c.l.b16 %v415
    %v455 = vunpack.c.l.b16 %v416
    %v456 = vunpack.c.l.b16 %v417
    %v457 = vunpack.c.l.b16 %v418
    %v458 = vunpack.c.l.b16 %v419
    %v459 = vunpack.c.l.b16 %v420
    %v460 = vunpack.c.l.b16 %v421
    %v461 = vunpack.c.l.b16 %v422
    %v462 = vpack.c.b16 %v447, %v446
    %v463 = vpack.c.b16 %v449, %v448
    %v464 = vpack.c.b16 %v451, %v450
    %v465 = vpack.c.b16 %v453, %v452
    %v466 = vpack.c.b16 %v455, %v454
    %v467 = vpack.c.b16 %v457, %v456
    %v468 = vpack.c.b16 %v459, %v458
    %v469 = vpack.c.b16 %v461, %v460
    %478 = vmatprep.subr.bf16.mxu0 0
    %479 = vmatpush1.bf16.msra.mxu0 %v469
    %480 = vmatprep.subr.bf16.mxu0 0
    %481 = vmatpush1.bf16.msra.mxu0 %v468
    %482 = vmatprep.subr.bf16.mxu0 0
    %483 = vmatpush1.bf16.msra.mxu0 %v467
    %484 = vmatprep.subr.bf16.mxu0 0
    %485 = vmatpush1.bf16.msra.mxu0 %v466
    %486 = vmatprep.subr.bf16.mxu0 0
    %487 = vmatpush1.bf16.msra.mxu0 %v465
    %488 = vmatprep.subr.bf16.mxu0 0
    %489 = vmatpush1.bf16.msra.mxu0 %v464
    %490 = vmatprep.subr.bf16.mxu0 0
    %491 = vmatpush1.bf16.msra.mxu0 %v463
    %492 = vmatprep.subr.bf16.mxu0 0
    %493 = vmatpush1.bf16.msra.mxu0 %v462
    %494 = vmatprep.subr.bf16.mxu0 0
    %495 = vmatpush2.bf16.msra.mxu0 0
    %496 = vmatprep.subr.bf16.mxu0 0
    %497 = vmatpush2.bf16.msra.mxu0 0
    %498 = vmatprep.subr.bf16.mxu0 0
    %499 = vmatpush2.bf16.msra.mxu0 0
    %500 = vmatprep.subr.bf16.mxu0 0
    %501 = vmatpush2.bf16.msra.mxu0 0
    %502 = vmatprep.subr.bf16.mxu0 0
    %503 = vmatpush2.bf16.msra.mxu0 0
    %504 = vmatprep.subr.bf16.mxu0 0
    %505 = vmatpush2.bf16.msra.mxu0 0
    %506 = vmatprep.subr.bf16.mxu0 0
    %507 = vmatpush2.bf16.msra.mxu0 0
    %508 = vmatprep.subr.bf16.mxu0 0
    %509 = vmatpush2.bf16.msra.mxu0 0
    %510 = vmatprep.mubr.bf16.mxu0 0
    %511 = vmatmul.mubr.bf16.gmra.mxu0 %v406
    %v512 = vpop.f32.mrf.mxu0
    %v513 = vadd.f32 %v428, %v512
    %v514 = vpop.f32.mrf.mxu0
    %v515 = vpop.f32.mrf.mxu0
    %v516 = vadd.f32 %v428, %v515
    %v517 = vpop.f32.mrf.mxu0
    %518 = vdwg.mxu0
    %519 = vst [vmem:[#allocation13] sm:$0xff] %v404
    %520 = vst [vmem:[#allocation13 + $0x8] sm:$0xff] %v405
    %521 = vst [vmem:[#allocation14] sm:$0xff] %v513
    %522 = vst [vmem:[#allocation14 + $0x8] sm:$0xff] %v516
    // Predicated region
    $region62: #{tpu_custom_call.1} parent=1 // pred_check
      _
    $region63: #{tpu_custom_call.1} parent=1 // pred_check_branch
      %524 = sbr.rel (0) target = $region65
    $region64: #{tpu_custom_call.1} parent=1 // pred_region
      %s526 = ssub.s32 256, 256
      %527 = vsyncadd [#allocation4], %s526
      %s528 = sshll.u32 [#allocation13], 4
      %s529 = int_to_ptr.vmem [resolvable:$true] %s528
      %534 = dma.vmem_to_hbm [thread:$0]  %s529, 256, %s9, [#allocation4], 128, 128, 8
    $region65: #{tpu_custom_call.1} parent=1 // pred_fallthru
      _
    // Predicated region
    $region66: #{tpu_custom_call.1} parent=1 // pred_check
      _
    $region67: #{tpu_custom_call.1} parent=1 // pred_check_branch
      %536 = sbr.rel (0) target = $region69
    $region68: #{tpu_custom_call.1} parent=1 // pred_region
      %s538 = ssub.s32 256, 256
      %539 = vsyncadd [#allocation15], %s538
      %s540 = sshll.u32 [#allocation14], 4
      %s541 = int_to_ptr.vmem [resolvable:$true] %s540
      %546 = dma.vmem_to_hbm [thread:$0]  %s541, 256, %s10, [#allocation15], 128, 128, 8
    $region69: #{tpu_custom_call.1} parent=1 // pred_fallthru
      _
    // Predicated region
    $region70: #{tpu_custom_call.1} parent=1 // pred_check
      _
    $region71: #{tpu_custom_call.1} parent=1 // pred_check_branch
      %548 = sbr.rel (0) target = $region73
    $region72: #{tpu_custom_call.1} parent=1 // pred_region
      %549 = dma.done [#allocation4], 256
    $region73: #{tpu_custom_call.1} parent=1 // pred_fallthru
      _
    // Predicated region
    $region74: #{tpu_custom_call.1} parent=1 // pred_check
      _
    $region75: #{tpu_custom_call.1} parent=1 // pred_check_branch
      %551 = sbr.rel (0) target = $region77
    $region76: #{tpu_custom_call.1} parent=1 // pred_region
      %552 = dma.done [#allocation15], 256
    $region77: #{tpu_custom_call.1} parent=1 // pred_fallthru
      _
    %553 = vsyncpa [#allocation3], 1
    %554 = vsyncpa [#allocation6], 1
    %555 = vsyncpa [#allocation9], 1
    %556 = vsyncpa [#allocation12], 1
    %557 = vsyncpa [#allocation4], 1
    %558 = vsyncpa [#allocation15], 1

</llo_original>
